<compile_context>
chip_gen: v7x
topology: tpu7x:2x2x1
jax: 0.10.0
libtpu: 0.0.40
codegen_flags: <defaults>
</compile_context>

<pallas_src>
import numpy as np
import jax
import jax.numpy as jnp
from jax.experimental import pallas as pl
from jax.experimental.pallas import tpu as pltpu


def _make_decoder_kernel(T, B, H):
    """Build the fused LSTM-decoder kernel for static (T, B, H)."""

    def kernel(x_ref, wih_ref, whh_ref, b_ref, wout_ref, bout_ref,
               out_ref, pre_scr, hs_scr):
        # x_ref   : (T*B, E)   time-major, flattened sequence input
        # wih_ref : (E, 4H)    whh_ref : (H, 4H)   b_ref : (1, 4H)  (b_ih+b_hh)
        # wout_ref: (H, V)     bout_ref: (1, V)
        # out_ref : (T*B, V)   logits, dense lane-width-128 slab
        # pre_scr : (T*B, 4H)  pre-computed input-projection gates (VMEM)
        # hs_scr  : (T*B, H)   per-step hidden states for batched projection

        # ---- Hoisted input projection: one MXU op for all timesteps. -------
        bias = b_ref[...]                                     # (1, 4H)
        pre_scr[...] = (
            jnp.dot(x_ref[...], wih_ref[...],
                    preferred_element_type=jnp.float32) + bias)

        whh = whh_ref[...]                                    # (H, 4H), resident

        # ---- Sequential recurrence: h/c live in vregs (loop carry). --------
        def step(t, carry):
            h, c = carry
            row = pl.multiple_of(t * B, B)
            gates = (pre_scr[pl.ds(row, B), :]
                     + jnp.dot(h, whh, preferred_element_type=jnp.float32))
            # PyTorch LSTM gate order: i, f, g, o.  Elementwise math in f32.
            i = jax.nn.sigmoid(gates[:, 0 * H:1 * H])
            f = jax.nn.sigmoid(gates[:, 1 * H:2 * H])
            g = jnp.tanh(gates[:, 2 * H:3 * H])
            o = jax.nn.sigmoid(gates[:, 3 * H:4 * H])
            c_new = f * c + i * g
            h_new = o * jnp.tanh(c_new)
            hs_scr[pl.ds(row, B), :] = h_new
            return (h_new, c_new)

        h0 = jnp.zeros((B, H), jnp.float32)
        c0 = jnp.zeros((B, H), jnp.float32)
        jax.lax.fori_loop(0, T, step, (h0, c0), unroll=True)

        # ---- Batched vocab projection: one (T*B,H)@(H,V) matmul + bias. ----
        out_ref[...] = (
            jnp.dot(hs_scr[...], wout_ref[...],
                    preferred_element_type=jnp.float32) + bout_ref[...])

    return kernel


@jax.jit
def decoder_rnn_forward(features, captions, embed_tbl,
                        w_ih, w_hh, b, w_out, b_out):
    """DecoderRNN.forward.

    features : (B, E) f32          captions : (B, T_cap) int32
    embed_tbl: (V, E) f32
    w_ih: (E, 4H)  w_hh: (H, 4H)  b: (1, 4H)   (= b_ih + b_hh, gate order i,f,g,o)
    w_out: (H, V)  b_out: (1, V)
    returns  : (B, T_cap, V) f32 logits   (T = (T_cap - 1) + 1 features step)
    """
    B, E = features.shape
    H = w_hh.shape[0]
    V = w_out.shape[1]

    # captions[:, :-1] -> embedding -> cat(features.unsqueeze(1), ., dim=1)
    capt = captions[:, :-1]
    emb = jnp.take(embed_tbl, capt, axis=0)                       # (B, T-1, E)
    x = jnp.concatenate([features[:, None, :], emb], axis=1)      # (B, T, E)
    T = x.shape[1]
    # Time-major, flattened to (T*B, E): the whole sequence is one dense VMEM
    # slab, so the input projection is a single matmul inside the kernel.
    x_flat = jnp.transpose(x, (1, 0, 2)).reshape(T * B, E).astype(jnp.float32)

    kernel = _make_decoder_kernel(T, B, H)
    vmem_spec = pl.BlockSpec(memory_space=pltpu.MemorySpace.VMEM)

    out_flat = pl.pallas_call(
        kernel,
        out_shape=jax.ShapeDtypeStruct((T * B, V), jnp.float32),
        in_specs=[vmem_spec] * 6,
        out_specs=vmem_spec,
        scratch_shapes=[pltpu.VMEM((T * B, 4 * H), jnp.float32),  # pre-gates
                        pltpu.VMEM((T * B, H), jnp.float32)],     # hidden states
    )(x_flat,
      w_ih.astype(jnp.float32), w_hh.astype(jnp.float32), b.astype(jnp.float32),
      w_out.astype(jnp.float32), b_out.astype(jnp.float32))

    # (T*B, V) -> (T, B, V) -> (B, T, V) to match PyTorch batch_first output.
    return jnp.transpose(out_flat.reshape(T, B, V), (1, 0, 2))


def _reference(features, captions, embed_tbl, w_ih, w_hh, b, w_out, b_out):
    """Plain-JAX reference mirroring the PyTorch module (lax.scan LSTM)."""
    B, E = features.shape
    H = w_hh.shape[0]
    capt = captions[:, :-1]
    emb = jnp.take(embed_tbl, capt, axis=0)
    x = jnp.concatenate([features[:, None, :], emb], axis=1)      # (B, T, E)

    def step(carry, x_t):
        h, c = carry
        gates = x_t @ w_ih + h @ w_hh + b
        i = jax.nn.sigmoid(gates[:, 0 * H:1 * H])
        f = jax.nn.sigmoid(gates[:, 1 * H:2 * H])
        g = jnp.tanh(gates[:, 2 * H:3 * H])
        o = jax.nn.sigmoid(gates[:, 3 * H:4 * H])
        c = f * c + i * g
        h = o * jnp.tanh(c)
        return (h, c), h

    h0 = jnp.zeros((B, H), jnp.float32)
    c0 = jnp.zeros((B, H), jnp.float32)
    _, hs = jax.lax.scan(step, (h0, c0), jnp.transpose(x, (1, 0, 2)))  # (T,B,H)
    out = hs @ w_out + b_out                                           # (T,B,V)
    return jnp.transpose(out, (1, 0, 2))                               # (B,T,V)


if __name__ == "__main__":
    key = jax.random.PRNGKey(0)
    ks = jax.random.split(key, 8)

    # Small shapes consistent with the module: batch=2, seq=8, embed=32,
    # hidden=32 (-> 4H = 128 gate lanes), vocab=128 (lane-dense output).
    B, T_CAP, E, H, V = 2, 8, 32, 32, 128

    features = jax.random.normal(ks[0], (B, E), jnp.float32)
    captions = jax.random.randint(ks[1], (B, T_CAP), 0, V, dtype=jnp.int32)
    embed_tbl = jax.random.normal(ks[2], (V, E), jnp.float32) * 0.1
    w_ih = jax.random.normal(ks[3], (E, 4 * H), jnp.float32) * 0.1
    w_hh = jax.random.normal(ks[4], (H, 4 * H), jnp.float32) * 0.1
    b = jax.random.normal(ks[5], (1, 4 * H), jnp.float32) * 0.1
    w_out = jax.random.normal(ks[6], (H, V), jnp.float32) * 0.1
    b_out = jax.random.normal(ks[7], (1, V), jnp.float32) * 0.1

    # TODO(synk): DecoderRNN.sample() (greedy decode with host-side .item()
    # sync per step) is a host loop and is not implemented as a kernel.
    out = decoder_rnn_forward(features, captions, embed_tbl,
                              w_ih, w_hh, b, w_out, b_out)
    jax.block_until_ready(out)

    ref = _reference(features, captions, embed_tbl, w_ih, w_hh, b, w_out, b_out)
    np.testing.assert_allclose(np.asarray(out), np.asarray(ref),
                               rtol=1e-2, atol=1e-2)
    print("KERNEL_OK")
</pallas_src>

<mosaic_0001>
module attributes {stable_mosaic.version = 11 : i64} {
  func.func @kernel(%arg0: memref<16x32xf32, #tpu.memory_space<vmem>>, %arg1: memref<32x128xf32, #tpu.memory_space<vmem>>, %arg2: memref<32x128xf32, #tpu.memory_space<vmem>>, %arg3: memref<1x128xf32, #tpu.memory_space<vmem>>, %arg4: memref<32x128xf32, #tpu.memory_space<vmem>>, %arg5: memref<1x128xf32, #tpu.memory_space<vmem>>, %arg6: memref<16x128xf32, #tpu.memory_space<vmem>>, %arg7: memref<16x128xf32, #tpu.memory_space<vmem>>, %arg8: memref<16x32xf32, #tpu.memory_space<vmem>>) attributes {dimension_semantics = [], scalar_prefetch = 0 : i64, scratch_operands = 2 : i64, tpu.core_type = #tpu.core_type<tc>} {
    %c0 = arith.constant 0 : index
    %c0_0 = arith.constant 0 : index
    %0 = vector.load %arg3[%c0, %c0_0] : memref<1x128xf32, #tpu.memory_space<vmem>>, vector<1x128xf32>
    %c0_1 = arith.constant 0 : index
    %c0_2 = arith.constant 0 : index
    %1 = vector.load %arg0[%c0_1, %c0_2] : memref<16x32xf32, #tpu.memory_space<vmem>>, vector<16x32xf32>
    %c0_3 = arith.constant 0 : index
    %c0_4 = arith.constant 0 : index
    %2 = vector.load %arg1[%c0_3, %c0_4] : memref<32x128xf32, #tpu.memory_space<vmem>>, vector<32x128xf32>
    %cst = arith.constant dense<0.000000e+00> : vector<16x128xf32>
    %3 = tpu.matmul %1, %2, %cst {dimension_numbers = #tpu.dot_dimension_numbers<[1], [0], [0], [1], [0, 0, 1, 1], [], []>} : vector<16x32xf32>, vector<32x128xf32>, vector<16x128xf32> -> vector<16x128xf32>
    %4 = vector.broadcast %0 : vector<1x128xf32> to vector<16x128xf32>
    %5 = arith.addf %3, %4 : vector<16x128xf32>
    %c0_5 = arith.constant 0 : index
    %c0_6 = arith.constant 0 : index
    %6 = vector.load %arg7[%c0_5, %c0_6] : memref<16x128xf32, #tpu.memory_space<vmem>>, vector<16x128xf32>
    tpu.vector_store %arg7[%c0_5, %c0_6], %5 {strides = array<i32>} : memref<16x128xf32, #tpu.memory_space<vmem>>, vector<16x128xf32>,
    %c0_7 = arith.constant 0 : index
    %c0_8 = arith.constant 0 : index
    %7 = vector.load %arg2[%c0_7, %c0_8] : memref<32x128xf32, #tpu.memory_space<vmem>>, vector<32x128xf32>
    %cst_9 = arith.constant 0.000000e+00 : f32
    %8 = vector.broadcast %cst_9 : f32 to vector<2x32xf32>
    %cst_10 = arith.constant 0.000000e+00 : f32
    %9 = vector.broadcast %cst_10 : f32 to vector<2x32xf32>
    %c0_i32 = arith.constant 0 : i32
    %c2_i32 = arith.constant 2 : i32
    %10 = arith.muli %c0_i32, %c2_i32 : i32
    %11 = tpu.assume_multiple %10, 2 : i32
    %12 = arith.index_cast %11 : i32 to index
    %c0_11 = arith.constant 0 : index
    %13 = vector.load %arg7[%12, %c0_11] : memref<16x128xf32, #tpu.memory_space<vmem>>, vector<2x128xf32>
    %cst_12 = arith.constant dense<0.000000e+00> : vector<2x128xf32>
    %14 = tpu.matmul %8, %7, %cst_12 {dimension_numbers = #tpu.dot_dimension_numbers<[1], [0], [0], [1], [0, 0, 1, 1], [], []>} : vector<2x32xf32>, vector<32x128xf32>, vector<2x128xf32> -> vector<2x128xf32>
    %15 = arith.addf %13, %14 : vector<2x128xf32>
    %16 = vector.extract_strided_slice %15 {offsets = [0, 0], sizes = [2, 32], strides = [1, 1]} : vector<2x128xf32> to vector<2x32xf32>
    %17 = arith.negf %16 : vector<2x32xf32>
    %18 = math.exp %17 : vector<2x32xf32>
    %cst_13 = arith.constant 1.000000e+00 : f32
    %19 = vector.broadcast %cst_13 : f32 to vector<2x32xf32>
    %20 = arith.addf %19, %18 : vector<2x32xf32>
    %21 = arith.divf %19, %20 : vector<2x32xf32>
    %22 = vector.extract_strided_slice %15 {offsets = [0, 32], sizes = [2, 32], strides = [1, 1]} : vector<2x128xf32> to vector<2x32xf32>
    %23 = arith.negf %22 : vector<2x32xf32>
    %24 = math.exp %23 : vector<2x32xf32>
    %cst_14 = arith.constant 1.000000e+00 : f32
    %25 = vector.broadcast %cst_14 : f32 to vector<2x32xf32>
    %26 = arith.addf %25, %24 : vector<2x32xf32>
    %27 = arith.divf %25, %26 : vector<2x32xf32>
    %28 = vector.extract_strided_slice %15 {offsets = [0, 64], sizes = [2, 32], strides = [1, 1]} : vector<2x128xf32> to vector<2x32xf32>
    %29 = math.tanh %28 : vector<2x32xf32>
    %30 = vector.extract_strided_slice %15 {offsets = [0, 96], sizes = [2, 32], strides = [1, 1]} : vector<2x128xf32> to vector<2x32xf32>
    %31 = arith.negf %30 : vector<2x32xf32>
    %32 = math.exp %31 : vector<2x32xf32>
    %cst_15 = arith.constant 1.000000e+00 : f32
    %33 = vector.broadcast %cst_15 : f32 to vector<2x32xf32>
    %34 = arith.addf %33, %32 : vector<2x32xf32>
    %35 = arith.divf %33, %34 : vector<2x32xf32>
    %36 = arith.mulf %27, %9 : vector<2x32xf32>
    %37 = arith.mulf %21, %29 : vector<2x32xf32>
    %38 = arith.addf %36, %37 : vector<2x32xf32>
    %39 = math.tanh %38 : vector<2x32xf32>
    %40 = arith.mulf %35, %39 : vector<2x32xf32>
    %41 = arith.index_cast %11 : i32 to index
    %c0_16 = arith.constant 0 : index
    %42 = vector.load %arg8[%41, %c0_16] : memref<16x32xf32, #tpu.memory_space<vmem>>, vector<2x32xf32>
    tpu.vector_store %arg8[%41, %c0_16], %40 {strides = array<i32>} : memref<16x32xf32, #tpu.memory_space<vmem>>, vector<2x32xf32>,
    %c1_i32 = arith.constant 1 : i32
    %c2_i32_17 = arith.constant 2 : i32
    %43 = arith.muli %c1_i32, %c2_i32_17 : i32
    %44 = tpu.assume_multiple %43, 2 : i32
    %45 = arith.index_cast %44 : i32 to index
    %c0_18 = arith.constant 0 : index
    %46 = vector.load %arg7[%45, %c0_18] : memref<16x128xf32, #tpu.memory_space<vmem>>, vector<2x128xf32>
    %cst_19 = arith.constant dense<0.000000e+00> : vector<2x128xf32>
    %47 = tpu.matmul %40, %7, %cst_19 {dimension_numbers = #tpu.dot_dimension_numbers<[1], [0], [0], [1], [0, 0, 1, 1], [], []>} : vector<2x32xf32>, vector<32x128xf32>, vector<2x128xf32> -> vector<2x128xf32>
    %48 = arith.addf %46, %47 : vector<2x128xf32>
    %49 = vector.extract_strided_slice %48 {offsets = [0, 0], sizes = [2, 32], strides = [1, 1]} : vector<2x128xf32> to vector<2x32xf32>
    %50 = arith.negf %49 : vector<2x32xf32>
    %51 = math.exp %50 : vector<2x32xf32>
    %cst_20 = arith.constant 1.000000e+00 : f32
    %52 = vector.broadcast %cst_20 : f32 to vector<2x32xf32>
    %53 = arith.addf %52, %51 : vector<2x32xf32>
    %54 = arith.divf %52, %53 : vector<2x32xf32>
    %55 = vector.extract_strided_slice %48 {offsets = [0, 32], sizes = [2, 32], strides = [1, 1]} : vector<2x128xf32> to vector<2x32xf32>
    %56 = arith.negf %55 : vector<2x32xf32>
    %57 = math.exp %56 : vector<2x32xf32>
    %cst_21 = arith.constant 1.000000e+00 : f32
    %58 = vector.broadcast %cst_21 : f32 to vector<2x32xf32>
    %59 = arith.addf %58, %57 : vector<2x32xf32>
    %60 = arith.divf %58, %59 : vector<2x32xf32>
    %61 = vector.extract_strided_slice %48 {offsets = [0, 64], sizes = [2, 32], strides = [1, 1]} : vector<2x128xf32> to vector<2x32xf32>
    %62 = math.tanh %61 : vector<2x32xf32>
    %63 = vector.extract_strided_slice %48 {offsets = [0, 96], sizes = [2, 32], strides = [1, 1]} : vector<2x128xf32> to vector<2x32xf32>
    %64 = arith.negf %63 : vector<2x32xf32>
    %65 = math.exp %64 : vector<2x32xf32>
    %cst_22 = arith.constant 1.000000e+00 : f32
    %66 = vector.broadcast %cst_22 : f32 to vector<2x32xf32>
    %67 = arith.addf %66, %65 : vector<2x32xf32>
    %68 = arith.divf %66, %67 : vector<2x32xf32>
    %69 = arith.mulf %60, %38 : vector<2x32xf32>
    %70 = arith.mulf %54, %62 : vector<2x32xf32>
    %71 = arith.addf %69, %70 : vector<2x32xf32>
    %72 = math.tanh %71 : vector<2x32xf32>
    %73 = arith.mulf %68, %72 : vector<2x32xf32>
    %74 = arith.index_cast %44 : i32 to index
    %c0_23 = arith.constant 0 : index
    %75 = vector.load %arg8[%74, %c0_23] : memref<16x32xf32, #tpu.memory_space<vmem>>, vector<2x32xf32>
    tpu.vector_store %arg8[%74, %c0_23], %73 {strides = array<i32>} : memref<16x32xf32, #tpu.memory_space<vmem>>, vector<2x32xf32>,
    %c2_i32_24 = arith.constant 2 : i32
    %c2_i32_25 = arith.constant 2 : i32
    %76 = arith.muli %c2_i32_24, %c2_i32_25 : i32
    %77 = tpu.assume_multiple %76, 2 : i32
    %78 = arith.index_cast %77 : i32 to index
    %c0_26 = arith.constant 0 : index
    %79 = vector.load %arg7[%78, %c0_26] : memref<16x128xf32, #tpu.memory_space<vmem>>, vector<2x128xf32>
    %cst_27 = arith.constant dense<0.000000e+00> : vector<2x128xf32>
    %80 = tpu.matmul %73, %7, %cst_27 {dimension_numbers = #tpu.dot_dimension_numbers<[1], [0], [0], [1], [0, 0, 1, 1], [], []>} : vector<2x32xf32>, vector<32x128xf32>, vector<2x128xf32> -> vector<2x128xf32>
    %81 = arith.addf %79, %80 : vector<2x128xf32>
    %82 = vector.extract_strided_slice %81 {offsets = [0, 0], sizes = [2, 32], strides = [1, 1]} : vector<2x128xf32> to vector<2x32xf32>
    %83 = arith.negf %82 : vector<2x32xf32>
    %84 = math.exp %83 : vector<2x32xf32>
    %cst_28 = arith.constant 1.000000e+00 : f32
    %85 = vector.broadcast %cst_28 : f32 to vector<2x32xf32>
    %86 = arith.addf %85, %84 : vector<2x32xf32>
    %87 = arith.divf %85, %86 : vector<2x32xf32>
    %88 = vector.extract_strided_slice %81 {offsets = [0, 32], sizes = [2, 32], strides = [1, 1]} : vector<2x128xf32> to vector<2x32xf32>
    %89 = arith.negf %88 : vector<2x32xf32>
    %90 = math.exp %89 : vector<2x32xf32>
    %cst_29 = arith.constant 1.000000e+00 : f32
    %91 = vector.broadcast %cst_29 : f32 to vector<2x32xf32>
    %92 = arith.addf %91, %90 : vector<2x32xf32>
    %93 = arith.divf %91, %92 : vector<2x32xf32>
    %94 = vector.extract_strided_slice %81 {offsets = [0, 64], sizes = [2, 32], strides = [1, 1]} : vector<2x128xf32> to vector<2x32xf32>
    %95 = math.tanh %94 : vector<2x32xf32>
    %96 = vector.extract_strided_slice %81 {offsets = [0, 96], sizes = [2, 32], strides = [1, 1]} : vector<2x128xf32> to vector<2x32xf32>
    %97 = arith.negf %96 : vector<2x32xf32>
    %98 = math.exp %97 : vector<2x32xf32>
    %cst_30 = arith.constant 1.000000e+00 : f32
    %99 = vector.broadcast %cst_30 : f32 to vector<2x32xf32>
    %100 = arith.addf %99, %98 : vector<2x32xf32>
    %101 = arith.divf %99, %100 : vector<2x32xf32>
    %102 = arith.mulf %93, %71 : vector<2x32xf32>
    %103 = arith.mulf %87, %95 : vector<2x32xf32>
    %104 = arith.addf %102, %103 : vector<2x32xf32>
    %105 = math.tanh %104 : vector<2x32xf32>
    %106 = arith.mulf %101, %105 : vector<2x32xf32>
    %107 = arith.index_cast %77 : i32 to index
    %c0_31 = arith.constant 0 : index
    %108 = vector.load %arg8[%107, %c0_31] : memref<16x32xf32, #tpu.memory_space<vmem>>, vector<2x32xf32>
    tpu.vector_store %arg8[%107, %c0_31], %106 {strides = array<i32>} : memref<16x32xf32, #tpu.memory_space<vmem>>, vector<2x32xf32>,
    %c3_i32 = arith.constant 3 : i32
    %c2_i32_32 = arith.constant 2 : i32
    %109 = arith.muli %c3_i32, %c2_i32_32 : i32
    %110 = tpu.assume_multiple %109, 2 : i32
    %111 = arith.index_cast %110 : i32 to index
    %c0_33 = arith.constant 0 : index
    %112 = vector.load %arg7[%111, %c0_33] : memref<16x128xf32, #tpu.memory_space<vmem>>, vector<2x128xf32>
    %cst_34 = arith.constant dense<0.000000e+00> : vector<2x128xf32>
    %113 = tpu.matmul %106, %7, %cst_34 {dimension_numbers = #tpu.dot_dimension_numbers<[1], [0], [0], [1], [0, 0, 1, 1], [], []>} : vector<2x32xf32>, vector<32x128xf32>, vector<2x128xf32> -> vector<2x128xf32>
    %114 = arith.addf %112, %113 : vector<2x128xf32>
    %115 = vector.extract_strided_slice %114 {offsets = [0, 0], sizes = [2, 32], strides = [1, 1]} : vector<2x128xf32> to vector<2x32xf32>
    %116 = arith.negf %115 : vector<2x32xf32>
    %117 = math.exp %116 : vector<2x32xf32>
    %cst_35 = arith.constant 1.000000e+00 : f32
    %118 = vector.broadcast %cst_35 : f32 to vector<2x32xf32>
    %119 = arith.addf %118, %117 : vector<2x32xf32>
    %120 = arith.divf %118, %119 : vector<2x32xf32>
    %121 = vector.extract_strided_slice %114 {offsets = [0, 32], sizes = [2, 32], strides = [1, 1]} : vector<2x128xf32> to vector<2x32xf32>
    %122 = arith.negf %121 : vector<2x32xf32>
    %123 = math.exp %122 : vector<2x32xf32>
    %cst_36 = arith.constant 1.000000e+00 : f32
    %124 = vector.broadcast %cst_36 : f32 to vector<2x32xf32>
    %125 = arith.addf %124, %123 : vector<2x32xf32>
    %126 = arith.divf %124, %125 : vector<2x32xf32>
    %127 = vector.extract_strided_slice %114 {offsets = [0, 64], sizes = [2, 32], strides = [1, 1]} : vector<2x128xf32> to vector<2x32xf32>
    %128 = math.tanh %127 : vector<2x32xf32>
    %129 = vector.extract_strided_slice %114 {offsets = [0, 96], sizes = [2, 32], strides = [1, 1]} : vector<2x128xf32> to vector<2x32xf32>
    %130 = arith.negf %129 : vector<2x32xf32>
    %131 = math.exp %130 : vector<2x32xf32>
    %cst_37 = arith.constant 1.000000e+00 : f32
    %132 = vector.broadcast %cst_37 : f32 to vector<2x32xf32>
    %133 = arith.addf %132, %131 : vector<2x32xf32>
    %134 = arith.divf %132, %133 : vector<2x32xf32>
    %135 = arith.mulf %126, %104 : vector<2x32xf32>
    %136 = arith.mulf %120, %128 : vector<2x32xf32>
    %137 = arith.addf %135, %136 : vector<2x32xf32>
    %138 = math.tanh %137 : vector<2x32xf32>
    %139 = arith.mulf %134, %138 : vector<2x32xf32>
    %140 = arith.index_cast %110 : i32 to index
    %c0_38 = arith.constant 0 : index
    %141 = vector.load %arg8[%140, %c0_38] : memref<16x32xf32, #tpu.memory_space<vmem>>, vector<2x32xf32>
    tpu.vector_store %arg8[%140, %c0_38], %139 {strides = array<i32>} : memref<16x32xf32, #tpu.memory_space<vmem>>, vector<2x32xf32>,
    %c4_i32 = arith.constant 4 : i32
    %c2_i32_39 = arith.constant 2 : i32
    %142 = arith.muli %c4_i32, %c2_i32_39 : i32
    %143 = tpu.assume_multiple %142, 2 : i32
    %144 = arith.index_cast %143 : i32 to index
    %c0_40 = arith.constant 0 : index
    %145 = vector.load %arg7[%144, %c0_40] : memref<16x128xf32, #tpu.memory_space<vmem>>, vector<2x128xf32>
    %cst_41 = arith.constant dense<0.000000e+00> : vector<2x128xf32>
    %146 = tpu.matmul %139, %7, %cst_41 {dimension_numbers = #tpu.dot_dimension_numbers<[1], [0], [0], [1], [0, 0, 1, 1], [], []>} : vector<2x32xf32>, vector<32x128xf32>, vector<2x128xf32> -> vector<2x128xf32>
    %147 = arith.addf %145, %146 : vector<2x128xf32>
    %148 = vector.extract_strided_slice %147 {offsets = [0, 0], sizes = [2, 32], strides = [1, 1]} : vector<2x128xf32> to vector<2x32xf32>
    %149 = arith.negf %148 : vector<2x32xf32>
    %150 = math.exp %149 : vector<2x32xf32>
    %cst_42 = arith.constant 1.000000e+00 : f32
    %151 = vector.broadcast %cst_42 : f32 to vector<2x32xf32>
    %152 = arith.addf %151, %150 : vector<2x32xf32>
    %153 = arith.divf %151, %152 : vector<2x32xf32>
    %154 = vector.extract_strided_slice %147 {offsets = [0, 32], sizes = [2, 32], strides = [1, 1]} : vector<2x128xf32> to vector<2x32xf32>
    %155 = arith.negf %154 : vector<2x32xf32>
    %156 = math.exp %155 : vector<2x32xf32>
    %cst_43 = arith.constant 1.000000e+00 : f32
    %157 = vector.broadcast %cst_43 : f32 to vector<2x32xf32>
    %158 = arith.addf %157, %156 : vector<2x32xf32>
    %159 = arith.divf %157, %158 : vector<2x32xf32>
    %160 = vector.extract_strided_slice %147 {offsets = [0, 64], sizes = [2, 32], strides = [1, 1]} : vector<2x128xf32> to vector<2x32xf32>
    %161 = math.tanh %160 : vector<2x32xf32>
    %162 = vector.extract_strided_slice %147 {offsets = [0, 96], sizes = [2, 32], strides = [1, 1]} : vector<2x128xf32> to vector<2x32xf32>
    %163 = arith.negf %162 : vector<2x32xf32>
    %164 = math.exp %163 : vector<2x32xf32>
    %cst_44 = arith.constant 1.000000e+00 : f32
    %165 = vector.broadcast %cst_44 : f32 to vector<2x32xf32>
    %166 = arith.addf %165, %164 : vector<2x32xf32>
    %167 = arith.divf %165, %166 : vector<2x32xf32>
    %168 = arith.mulf %159, %137 : vector<2x32xf32>
    %169 = arith.mulf %153, %161 : vector<2x32xf32>
    %170 = arith.addf %168, %169 : vector<2x32xf32>
    %171 = math.tanh %170 : vector<2x32xf32>
    %172 = arith.mulf %167, %171 : vector<2x32xf32>
    %173 = arith.index_cast %143 : i32 to index
    %c0_45 = arith.constant 0 : index
    %174 = vector.load %arg8[%173, %c0_45] : memref<16x32xf32, #tpu.memory_space<vmem>>, vector<2x32xf32>
    tpu.vector_store %arg8[%173, %c0_45], %172 {strides = array<i32>} : memref<16x32xf32, #tpu.memory_space<vmem>>, vector<2x32xf32>,
    %c5_i32 = arith.constant 5 : i32
    %c2_i32_46 = arith.constant 2 : i32
    %175 = arith.muli %c5_i32, %c2_i32_46 : i32
    %176 = tpu.assume_multiple %175, 2 : i32
    %177 = arith.index_cast %176 : i32 to index
    %c0_47 = arith.constant 0 : index
    %178 = vector.load %arg7[%177, %c0_47] : memref<16x128xf32, #tpu.memory_space<vmem>>, vector<2x128xf32>
    %cst_48 = arith.constant dense<0.000000e+00> : vector<2x128xf32>
    %179 = tpu.matmul %172, %7, %cst_48 {dimension_numbers = #tpu.dot_dimension_numbers<[1], [0], [0], [1], [0, 0, 1, 1], [], []>} : vector<2x32xf32>, vector<32x128xf32>, vector<2x128xf32> -> vector<2x128xf32>
    %180 = arith.addf %178, %179 : vector<2x128xf32>
    %181 = vector.extract_strided_slice %180 {offsets = [0, 0], sizes = [2, 32], strides = [1, 1]} : vector<2x128xf32> to vector<2x32xf32>
    %182 = arith.negf %181 : vector<2x32xf32>
    %183 = math.exp %182 : vector<2x32xf32>
    %cst_49 = arith.constant 1.000000e+00 : f32
    %184 = vector.broadcast %cst_49 : f32 to vector<2x32xf32>
    %185 = arith.addf %184, %183 : vector<2x32xf32>
    %186 = arith.divf %184, %185 : vector<2x32xf32>
    %187 = vector.extract_strided_slice %180 {offsets = [0, 32], sizes = [2, 32], strides = [1, 1]} : vector<2x128xf32> to vector<2x32xf32>
    %188 = arith.negf %187 : vector<2x32xf32>
    %189 = math.exp %188 : vector<2x32xf32>
    %cst_50 = arith.constant 1.000000e+00 : f32
    %190 = vector.broadcast %cst_50 : f32 to vector<2x32xf32>
    %191 = arith.addf %190, %189 : vector<2x32xf32>
    %192 = arith.divf %190, %191 : vector<2x32xf32>
    %193 = vector.extract_strided_slice %180 {offsets = [0, 64], sizes = [2, 32], strides = [1, 1]} : vector<2x128xf32> to vector<2x32xf32>
    %194 = math.tanh %193 : vector<2x32xf32>
    %195 = vector.extract_strided_slice %180 {offsets = [0, 96], sizes = [2, 32], strides = [1, 1]} : vector<2x128xf32> to vector<2x32xf32>
    %196 = arith.negf %195 : vector<2x32xf32>
    %197 = math.exp %196 : vector<2x32xf32>
    %cst_51 = arith.constant 1.000000e+00 : f32
    %198 = vector.broadcast %cst_51 : f32 to vector<2x32xf32>
    %199 = arith.addf %198, %197 : vector<2x32xf32>
    %200 = arith.divf %198, %199 : vector<2x32xf32>
    %201 = arith.mulf %192, %170 : vector<2x32xf32>
    %202 = arith.mulf %186, %194 : vector<2x32xf32>
    %203 = arith.addf %201, %202 : vector<2x32xf32>
    %204 = math.tanh %203 : vector<2x32xf32>
    %205 = arith.mulf %200, %204 : vector<2x32xf32>
    %206 = arith.index_cast %176 : i32 to index
    %c0_52 = arith.constant 0 : index
    %207 = vector.load %arg8[%206, %c0_52] : memref<16x32xf32, #tpu.memory_space<vmem>>, vector<2x32xf32>
    tpu.vector_store %arg8[%206, %c0_52], %205 {strides = array<i32>} : memref<16x32xf32, #tpu.memory_space<vmem>>, vector<2x32xf32>,
    %c6_i32 = arith.constant 6 : i32
    %c2_i32_53 = arith.constant 2 : i32
    %208 = arith.muli %c6_i32, %c2_i32_53 : i32
    %209 = tpu.assume_multiple %208, 2 : i32
    %210 = arith.index_cast %209 : i32 to index
    %c0_54 = arith.constant 0 : index
    %211 = vector.load %arg7[%210, %c0_54] : memref<16x128xf32, #tpu.memory_space<vmem>>, vector<2x128xf32>
    %cst_55 = arith.constant dense<0.000000e+00> : vector<2x128xf32>
    %212 = tpu.matmul %205, %7, %cst_55 {dimension_numbers = #tpu.dot_dimension_numbers<[1], [0], [0], [1], [0, 0, 1, 1], [], []>} : vector<2x32xf32>, vector<32x128xf32>, vector<2x128xf32> -> vector<2x128xf32>
    %213 = arith.addf %211, %212 : vector<2x128xf32>
    %214 = vector.extract_strided_slice %213 {offsets = [0, 0], sizes = [2, 32], strides = [1, 1]} : vector<2x128xf32> to vector<2x32xf32>
    %215 = arith.negf %214 : vector<2x32xf32>
    %216 = math.exp %215 : vector<2x32xf32>
    %cst_56 = arith.constant 1.000000e+00 : f32
    %217 = vector.broadcast %cst_56 : f32 to vector<2x32xf32>
    %218 = arith.addf %217, %216 : vector<2x32xf32>
    %219 = arith.divf %217, %218 : vector<2x32xf32>
    %220 = vector.extract_strided_slice %213 {offsets = [0, 32], sizes = [2, 32], strides = [1, 1]} : vector<2x128xf32> to vector<2x32xf32>
    %221 = arith.negf %220 : vector<2x32xf32>
    %222 = math.exp %221 : vector<2x32xf32>
    %cst_57 = arith.constant 1.000000e+00 : f32
    %223 = vector.broadcast %cst_57 : f32 to vector<2x32xf32>
    %224 = arith.addf %223, %222 : vector<2x32xf32>
    %225 = arith.divf %223, %224 : vector<2x32xf32>
    %226 = vector.extract_strided_slice %213 {offsets = [0, 64], sizes = [2, 32], strides = [1, 1]} : vector<2x128xf32> to vector<2x32xf32>
    %227 = math.tanh %226 : vector<2x32xf32>
    %228 = vector.extract_strided_slice %213 {offsets = [0, 96], sizes = [2, 32], strides = [1, 1]} : vector<2x128xf32> to vector<2x32xf32>
    %229 = arith.negf %228 : vector<2x32xf32>
    %230 = math.exp %229 : vector<2x32xf32>
    %cst_58 = arith.constant 1.000000e+00 : f32
    %231 = vector.broadcast %cst_58 : f32 to vector<2x32xf32>
    %232 = arith.addf %231, %230 : vector<2x32xf32>
    %233 = arith.divf %231, %232 : vector<2x32xf32>
    %234 = arith.mulf %225, %203 : vector<2x32xf32>
    %235 = arith.mulf %219, %227 : vector<2x32xf32>
    %236 = arith.addf %234, %235 : vector<2x32xf32>
    %237 = math.tanh %236 : vector<2x32xf32>
    %238 = arith.mulf %233, %237 : vector<2x32xf32>
    %239 = arith.index_cast %209 : i32 to index
    %c0_59 = arith.constant 0 : index
    %240 = vector.load %arg8[%239, %c0_59] : memref<16x32xf32, #tpu.memory_space<vmem>>, vector<2x32xf32>
    tpu.vector_store %arg8[%239, %c0_59], %238 {strides = array<i32>} : memref<16x32xf32, #tpu.memory_space<vmem>>, vector<2x32xf32>,
    %c7_i32 = arith.constant 7 : i32
    %c2_i32_60 = arith.constant 2 : i32
    %241 = arith.muli %c7_i32, %c2_i32_60 : i32
    %242 = tpu.assume_multiple %241, 2 : i32
    %243 = arith.index_cast %242 : i32 to index
    %c0_61 = arith.constant 0 : index
    %244 = vector.load %arg7[%243, %c0_61] : memref<16x128xf32, #tpu.memory_space<vmem>>, vector<2x128xf32>
    %cst_62 = arith.constant dense<0.000000e+00> : vector<2x128xf32>
    %245 = tpu.matmul %238, %7, %cst_62 {dimension_numbers = #tpu.dot_dimension_numbers<[1], [0], [0], [1], [0, 0, 1, 1], [], []>} : vector<2x32xf32>, vector<32x128xf32>, vector<2x128xf32> -> vector<2x128xf32>
    %246 = arith.addf %244, %245 : vector<2x128xf32>
    %247 = vector.extract_strided_slice %246 {offsets = [0, 0], sizes = [2, 32], strides = [1, 1]} : vector<2x128xf32> to vector<2x32xf32>
    %248 = arith.negf %247 : vector<2x32xf32>
    %249 = math.exp %248 : vector<2x32xf32>
    %cst_63 = arith.constant 1.000000e+00 : f32
    %250 = vector.broadcast %cst_63 : f32 to vector<2x32xf32>
    %251 = arith.addf %250, %249 : vector<2x32xf32>
    %252 = arith.divf %250, %251 : vector<2x32xf32>
    %253 = vector.extract_strided_slice %246 {offsets = [0, 32], sizes = [2, 32], strides = [1, 1]} : vector<2x128xf32> to vector<2x32xf32>
    %254 = arith.negf %253 : vector<2x32xf32>
    %255 = math.exp %254 : vector<2x32xf32>
    %cst_64 = arith.constant 1.000000e+00 : f32
    %256 = vector.broadcast %cst_64 : f32 to vector<2x32xf32>
    %257 = arith.addf %256, %255 : vector<2x32xf32>
    %258 = arith.divf %256, %257 : vector<2x32xf32>
    %259 = vector.extract_strided_slice %246 {offsets = [0, 64], sizes = [2, 32], strides = [1, 1]} : vector<2x128xf32> to vector<2x32xf32>
    %260 = math.tanh %259 : vector<2x32xf32>
    %261 = vector.extract_strided_slice %246 {offsets = [0, 96], sizes = [2, 32], strides = [1, 1]} : vector<2x128xf32> to vector<2x32xf32>
    %262 = arith.negf %261 : vector<2x32xf32>
    %263 = math.exp %262 : vector<2x32xf32>
    %cst_65 = arith.constant 1.000000e+00 : f32
    %264 = vector.broadcast %cst_65 : f32 to vector<2x32xf32>
    %265 = arith.addf %264, %263 : vector<2x32xf32>
    %266 = arith.divf %264, %265 : vector<2x32xf32>
    %267 = arith.mulf %258, %236 : vector<2x32xf32>
    %268 = arith.mulf %252, %260 : vector<2x32xf32>
    %269 = arith.addf %267, %268 : vector<2x32xf32>
    %270 = math.tanh %269 : vector<2x32xf32>
    %271 = arith.mulf %266, %270 : vector<2x32xf32>
    %272 = arith.index_cast %242 : i32 to index
    %c0_66 = arith.constant 0 : index
    %273 = vector.load %arg8[%272, %c0_66] : memref<16x32xf32, #tpu.memory_space<vmem>>, vector<2x32xf32>
    tpu.vector_store %arg8[%272, %c0_66], %271 {strides = array<i32>} : memref<16x32xf32, #tpu.memory_space<vmem>>, vector<2x32xf32>,
    %c8_i32 = arith.constant 8 : i32
    %c0_67 = arith.constant 0 : index
    %c0_68 = arith.constant 0 : index
    %274 = vector.load %arg8[%c0_67, %c0_68] : memref<16x32xf32, #tpu.memory_space<vmem>>, vector<16x32xf32>
    %c0_69 = arith.constant 0 : index
    %c0_70 = arith.constant 0 : index
    %275 = vector.load %arg4[%c0_69, %c0_70] : memref<32x128xf32, #tpu.memory_space<vmem>>, vector<32x128xf32>
    %cst_71 = arith.constant dense<0.000000e+00> : vector<16x128xf32>
    %276 = tpu.matmul %274, %275, %cst_71 {dimension_numbers = #tpu.dot_dimension_numbers<[1], [0], [0], [1], [0, 0, 1, 1], [], []>} : vector<16x32xf32>, vector<32x128xf32>, vector<16x128xf32> -> vector<16x128xf32>
    %c0_72 = arith.constant 0 : index
    %c0_73 = arith.constant 0 : index
    %277 = vector.load %arg5[%c0_72, %c0_73] : memref<1x128xf32, #tpu.memory_space<vmem>>, vector<1x128xf32>
    %278 = vector.broadcast %277 : vector<1x128xf32> to vector<16x128xf32>
    %279 = arith.addf %276, %278 : vector<16x128xf32>
    %c0_74 = arith.constant 0 : index
    %c0_75 = arith.constant 0 : index
    %280 = vector.load %arg6[%c0_74, %c0_75] : memref<16x128xf32, #tpu.memory_space<vmem>>, vector<16x128xf32>
    tpu.vector_store %arg6[%c0_74, %c0_75], %279 {strides = array<i32>} : memref<16x128xf32, #tpu.memory_space<vmem>>, vector<16x128xf32>,
    return
  }
}

</mosaic_0001>

<llo_original>
// kernel: decoder_rnn_forward.1
$region0: #{decoder_rnn_forward.1}
  #allocation0 [shape = 'u32[]', space=smem, size = 0x4, offset = 0x4, fixed_abs, tag = 'smem constant byte address 0x4 - core index']
  #allocation1 [shape = 'u32[144,128]{1,0:T(1,128)}', space=vmem, size = 0x12000, scoped, tag = 'internal scratch']
  #allocation2 [shape = 'f32[16,128]{1,0:T(8,128)}', space=vmem, size = 0x2000, scoped, tag = 'scratch operand']
  #allocation3 [shape = 'f32[16,32]{1,0:T(8,128)}', space=vmem, size = 0x2000, scoped, tag = 'scratch operand']
  %s0 = inlined_call_operand.vmem [shape: f32[16,32], index: 0, kind: input, shape index: {}]
  %s1 = inlined_call_operand.vmem [shape: f32[32,128], index: 1, kind: input, shape index: {}]
  %s2 = inlined_call_operand.vmem [shape: f32[32,128], index: 2, kind: input, shape index: {}]
  %s3 = inlined_call_operand.vmem [shape: f32[1,128], index: 3, kind: input, shape index: {}]
  %s4 = inlined_call_operand.vmem [shape: f32[32,128], index: 4, kind: input, shape index: {}]
  %s5 = inlined_call_operand.vmem [shape: f32[1,128], index: 5, kind: input, shape index: {}]
  %s6 = inlined_call_operand.vmem [shape: f32[16,128], index: 6, kind: output, shape index: {}]
  %s7 = sld [smem:[#allocation0]]
  $region34: #{decoder_rnn_forward.1} parent=0
    _
  %s9 = ssub.s32 1, %s7
  %s10 = scalar_select 0, %s9, %s7
  // Predicated region
  $region2: #{decoder_rnn_forward.1} parent=0 // pred_check
    _
  $region3: #{decoder_rnn_forward.1} parent=0 // pred_check_branch
    %12 = sbr.rel (0) target = $region5
  $region4: #{decoder_rnn_forward.1} parent=0 // pred_region
    _
  $region5: #{decoder_rnn_forward.1} parent=0 // pred_fallthru
    _
  // Predicated region
  $region6: #{decoder_rnn_forward.1} parent=0 // pred_check
    _
  $region7: #{decoder_rnn_forward.1} parent=0 // pred_check_branch
    %14 = sbr.rel (0) target = $region9
  $region8: #{decoder_rnn_forward.1} parent=0 // pred_region
    _
  $region9: #{decoder_rnn_forward.1} parent=0 // pred_fallthru
    _
  // Predicated region
  $region10: #{decoder_rnn_forward.1} parent=0 // pred_check
    _
  $region11: #{decoder_rnn_forward.1} parent=0 // pred_check_branch
    %16 = sbr.rel (0) target = $region13
  $region12: #{decoder_rnn_forward.1} parent=0 // pred_region
    _
  $region13: #{decoder_rnn_forward.1} parent=0 // pred_fallthru
    _
  // Predicated region
  $region14: #{decoder_rnn_forward.1} parent=0 // pred_check
    _
  $region15: #{decoder_rnn_forward.1} parent=0 // pred_check_branch
    %18 = sbr.rel (0) target = $region17
  $region16: #{decoder_rnn_forward.1} parent=0 // pred_region
    _
  $region17: #{decoder_rnn_forward.1} parent=0 // pred_fallthru
    _
  // Predicated region
  $region18: #{decoder_rnn_forward.1} parent=0 // pred_check
    _
  $region19: #{decoder_rnn_forward.1} parent=0 // pred_check_branch
    %20 = sbr.rel (0) target = $region21
  $region20: #{decoder_rnn_forward.1} parent=0 // pred_region
    _
  $region21: #{decoder_rnn_forward.1} parent=0 // pred_fallthru
    _
  // Predicated region
  $region22: #{decoder_rnn_forward.1} parent=0 // pred_check
    _
  $region23: #{decoder_rnn_forward.1} parent=0 // pred_check_branch
    %22 = sbr.rel (0) target = $region25
  $region24: #{decoder_rnn_forward.1} parent=0 // pred_region
    _
  $region25: #{decoder_rnn_forward.1} parent=0 // pred_fallthru
    _
  %v23 = vld [vmem:[%s3] sm:$0x1]
  %v24 = vld [vmem:[%s0] sm:$0xff]
  %v25 = vld [vmem:[%s0 + $0x8] sm:$0xff]
  %v26 = vld [vmem:[%s1] sm:$0xff]
  %v27 = vld [vmem:[%s1 + $0x8] sm:$0xff]
  %v28 = vld [vmem:[%s1 + $0x10] sm:$0xff]
  %v29 = vld [vmem:[%s1 + $0x18] sm:$0xff]
  %v31 = vlaneseq
  %v32 = vshrl.u32 %v31, 7
  %v33 = vsub.s32 0, %v32
  %v34 = vrot.slane %v23, %v33
  %vm36 = vcmask 261120
  %v38 = vsel %vm36, %v24, 0
  %v41 = vsel %vm36, %v25, 0
  %43 = vmatprep.subr.mxu0 0.0
  %44 = vmatpush1.msra.mxu0 %v26
  %45 = vmatprep.subr.mxu0 0.0
  %46 = vmatpush1.msra.mxu0 %v27
  %47 = vmatprep.subr.mxu0 0.0
  %48 = vmatpush1.msra.mxu0 %v28
  %49 = vmatprep.subr.mxu0 0.0
  %50 = vmatpush1.msra.mxu0 %v29
  %51 = vmatprep.subr.mxu0 0.0
  %52 = vmatpush1.msra.mxu0 0.0
  %53 = vmatprep.subr.mxu0 0.0
  %54 = vmatpush1.msra.mxu0 0.0
  %55 = vmatprep.subr.mxu0 0.0
  %56 = vmatpush1.msra.mxu0 0.0
  %57 = vmatprep.subr.mxu0 0.0
  %58 = vmatpush1.msra.mxu0 0.0
  %59 = vmatprep.subr.mxu0 0.0
  %60 = vmatpush1.msra.mxu0 0.0
  %61 = vmatprep.subr.mxu0 0.0
  %62 = vmatpush1.msra.mxu0 0.0
  %63 = vmatprep.subr.mxu0 0.0
  %64 = vmatpush1.msra.mxu0 0.0
  %65 = vmatprep.subr.mxu0 0.0
  %66 = vmatpush1.msra.mxu0 0.0
  %67 = vmatprep.subr.mxu0 0.0
  %68 = vmatpush1.msra.mxu0 0.0
  %69 = vmatprep.subr.mxu0 0.0
  %70 = vmatpush1.msra.mxu0 0.0
  %71 = vmatprep.subr.mxu0 0.0
  %72 = vmatpush1.msra.mxu0 0.0
  %73 = vmatprep.subr.mxu0 0.0
  %74 = vmatpush1.msra.mxu0 0.0
  %75 = vmatprep.subr.mxu0 0.0
  %76 = vmatpush1.msra.mxu0 0.0
  %77 = vmatprep.subr.mxu0 0.0
  %78 = vmatpush1.msra.mxu0 0.0
  %79 = vmatprep.subr.mxu0 0.0
  %80 = vmatpush1.msra.mxu0 0.0
  %81 = vmatprep.subr.mxu0 0.0
  %82 = vmatpush1.msra.mxu0 0.0
  %83 = vmatprep.subr.mxu0 0.0
  %84 = vmatpush1.msra.mxu0 0.0
  %85 = vmatprep.subr.mxu0 0.0
  %86 = vmatpush1.msra.mxu0 0.0
  %87 = vmatprep.subr.mxu0 0.0
  %88 = vmatpush1.msra.mxu0 0.0
  %89 = vmatprep.subr.mxu0 0.0
  %90 = vmatpush1.msra.mxu0 0.0
  %91 = vmatprep.subr.mxu0 0.0
  %92 = vmatpush1.msra.mxu0 0.0
  %93 = vmatprep.subr.mxu0 0.0
  %94 = vmatpush1.msra.mxu0 0.0
  %95 = vmatprep.subr.mxu0 0.0
  %96 = vmatpush1.msra.mxu0 0.0
  %97 = vmatprep.subr.mxu0 0.0
  %98 = vmatpush1.msra.mxu0 0.0
  %99 = vmatprep.subr.mxu0 0.0
  %100 = vmatpush1.msra.mxu0 0.0
  %101 = vmatprep.subr.mxu0 0.0
  %102 = vmatpush1.msra.mxu0 0.0
  %103 = vmatprep.subr.mxu0 0.0
  %104 = vmatpush1.msra.mxu0 0.0
  %105 = vmatprep.subr.mxu0 0.0
  %106 = vmatpush1.msra.mxu0 0.0
  %107 = vmatprep.mubr.f32.mxu0 0.0
  %108 = vmatmul.mubr.f32.gmra.mrb[0].mxu0 %v38
  %v109 = vpop.f32.mrb[0].mxu0
  %v110 = vadd.f32 %v34, %v109
  %v111 = vpop.f32.mrb[0].mxu0
  %112 = vmatprep.mubr.f32.mxu0 0.0
  %113 = vmatmul.mubr.f32.gmra.mrb[0].mxu0 %v41
  %v114 = vpop.f32.mrb[0].mxu0
  %v115 = vadd.f32 %v34, %v114
  %v116 = vpop.f32.mrb[0].mxu0
  %117 = vdwg.mxu0
  %118 = vst [vmem:[#allocation2] sm:$0xff] %v110
  %119 = vst [vmem:[#allocation2 + $0x8] sm:$0xff] %v115
  %v120 = vld [vmem:[%s2] sm:$0xff]
  %v121 = vld [vmem:[%s2 + $0x8] sm:$0xff]
  %v122 = vld [vmem:[%s2 + $0x10] sm:$0xff]
  %v123 = vld [vmem:[%s2 + $0x18] sm:$0xff]
  %v124 = vld [vmem:[#allocation2] sm:$0x3]
  %v126 = vsel %vm36, 0.0, 0
  %128 = vmatprep.subr.mxu0 0.0
  %129 = vmatpush1.msra.mxu0 %v120
  %130 = vmatprep.subr.mxu0 0.0
  %131 = vmatpush1.msra.mxu0 %v121
  %132 = vmatprep.subr.mxu0 0.0
  %133 = vmatpush1.msra.mxu0 %v122
  %134 = vmatprep.subr.mxu0 0.0
  %135 = vmatpush1.msra.mxu0 %v123
  %136 = vmatprep.subr.mxu0 0.0
  %137 = vmatpush1.msra.mxu0 0.0
  %138 = vmatprep.subr.mxu0 0.0
  %139 = vmatpush1.msra.mxu0 0.0
  %140 = vmatprep.subr.mxu0 0.0
  %141 = vmatpush1.msra.mxu0 0.0
  %142 = vmatprep.subr.mxu0 0.0
  %143 = vmatpush1.msra.mxu0 0.0
  %144 = vmatprep.subr.mxu0 0.0
  %145 = vmatpush1.msra.mxu0 0.0
  %146 = vmatprep.subr.mxu0 0.0
  %147 = vmatpush1.msra.mxu0 0.0
  %148 = vmatprep.subr.mxu0 0.0
  %149 = vmatpush1.msra.mxu0 0.0
  %150 = vmatprep.subr.mxu0 0.0
  %151 = vmatpush1.msra.mxu0 0.0
  %152 = vmatprep.subr.mxu0 0.0
  %153 = vmatpush1.msra.mxu0 0.0
  %154 = vmatprep.subr.mxu0 0.0
  %155 = vmatpush1.msra.mxu0 0.0
  %156 = vmatprep.subr.mxu0 0.0
  %157 = vmatpush1.msra.mxu0 0.0
  %158 = vmatprep.subr.mxu0 0.0
  %159 = vmatpush1.msra.mxu0 0.0
  %160 = vmatprep.subr.mxu0 0.0
  %161 = vmatpush1.msra.mxu0 0.0
  %162 = vmatprep.subr.mxu0 0.0
  %163 = vmatpush1.msra.mxu0 0.0
  %164 = vmatprep.subr.mxu0 0.0
  %165 = vmatpush1.msra.mxu0 0.0
  %166 = vmatprep.subr.mxu0 0.0
  %167 = vmatpush1.msra.mxu0 0.0
  %168 = vmatprep.subr.mxu0 0.0
  %169 = vmatpush1.msra.mxu0 0.0
  %170 = vmatprep.subr.mxu0 0.0
  %171 = vmatpush1.msra.mxu0 0.0
  %172 = vmatprep.subr.mxu0 0.0
  %173 = vmatpush1.msra.mxu0 0.0
  %174 = vmatprep.subr.mxu0 0.0
  %175 = vmatpush1.msra.mxu0 0.0
  %176 = vmatprep.subr.mxu0 0.0
  %177 = vmatpush1.msra.mxu0 0.0
  %178 = vmatprep.subr.mxu0 0.0
  %179 = vmatpush1.msra.mxu0 0.0
  %180 = vmatprep.subr.mxu0 0.0
  %181 = vmatpush1.msra.mxu0 0.0
  %182 = vmatprep.subr.mxu0 0.0
  %183 = vmatpush1.msra.mxu0 0.0
  %184 = vmatprep.subr.mxu0 0.0
  %185 = vmatpush1.msra.mxu0 0.0
  %186 = vmatprep.subr.mxu0 0.0
  %187 = vmatpush1.msra.mxu0 0.0
  %188 = vmatprep.subr.mxu0 0.0
  %189 = vmatpush1.msra.mxu0 0.0
  %190 = vmatprep.subr.mxu0 0.0
  %191 = vmatpush1.msra.mxu0 0.0
  %192 = vmatprep.mubr.f32.mxu0 0.0
  %193 = vmatmul.mubr.f32.gmra.mrb[0].mxu0 %v126
  %v194 = vpop.f32.mrb[0].mxu0
  %v195 = vadd.f32 0.0, %v194
  %v196 = vpop.f32.mrb[0].mxu0
  %197 = vdwg.mxu0
  %v198 = vadd.f32 %v124, %v195
  %v199 = vxor.u32 %v198, 2147483648
  %v200 = vmul.f32 %v199, 1.442695
  %v201 = vpow.pop %v200
  %v202 = vadd.f32 %v201, 1.0
  %v203 = vrcp.pop %v202
  %v204 = vmul.f32 1.0, %v203
  %v205 = vtanh.pop %v198
  %v206 = vmul.f32 %v204, 0.0
  %208 = vrot.lane.b32.xlu0 %v205, 64
  %v209 = vpop.permute.xlu0 %208
  %v211 = vmul.f32 %v204, %v209
  %213 = vrot.lane.b32.xlu0 %v211, 32
  %v214 = vpop.permute.xlu0 %213
  %v216 = vadd.f32 %v206, %v214
  %v217 = vtanh.pop %v216
  %219 = vrot.lane.b32.xlu0 %v217, 64
  %v220 = vpop.permute.xlu0 %219
  %v222 = vmul.f32 %v204, %v220
  %224 = vrot.lane.b32.xlu0 %v222, 32
  %v225 = vpop.permute.xlu0 %224
  %vm227 = vcmask 254976
  %228 = vst.msk [vmem:[#allocation3] sm:$0x3] %vm227, %v225
  %s229 = scalar_lea.vmem [#allocation2], 2
  %v230 = vld [vmem:[%s229] sm:$0x3]
  %v231 = vsel %vm36, %v225, 0
  %233 = vmatprep.subr.mxu0 0.0
  %234 = vmatpush1.msra.mxu0 %v120
  %235 = vmatprep.subr.mxu0 0.0
  %236 = vmatpush1.msra.mxu0 %v121
  %237 = vmatprep.subr.mxu0 0.0
  %238 = vmatpush1.msra.mxu0 %v122
  %239 = vmatprep.subr.mxu0 0.0
  %240 = vmatpush1.msra.mxu0 %v123
  %241 = vmatprep.subr.mxu0 0.0
  %242 = vmatpush1.msra.mxu0 0.0
  %243 = vmatprep.subr.mxu0 0.0
  %244 = vmatpush1.msra.mxu0 0.0
  %245 = vmatprep.subr.mxu0 0.0
  %246 = vmatpush1.msra.mxu0 0.0
  %247 = vmatprep.subr.mxu0 0.0
  %248 = vmatpush1.msra.mxu0 0.0
  %249 = vmatprep.subr.mxu0 0.0
  %250 = vmatpush1.msra.mxu0 0.0
  %251 = vmatprep.subr.mxu0 0.0
  %252 = vmatpush1.msra.mxu0 0.0
  %253 = vmatprep.subr.mxu0 0.0
  %254 = vmatpush1.msra.mxu0 0.0
  %255 = vmatprep.subr.mxu0 0.0
  %256 = vmatpush1.msra.mxu0 0.0
  %257 = vmatprep.subr.mxu0 0.0
  %258 = vmatpush1.msra.mxu0 0.0
  %259 = vmatprep.subr.mxu0 0.0
  %260 = vmatpush1.msra.mxu0 0.0
  %261 = vmatprep.subr.mxu0 0.0
  %262 = vmatpush1.msra.mxu0 0.0
  %263 = vmatprep.subr.mxu0 0.0
  %264 = vmatpush1.msra.mxu0 0.0
  %265 = vmatprep.subr.mxu0 0.0
  %266 = vmatpush1.msra.mxu0 0.0
  %267 = vmatprep.subr.mxu0 0.0
  %268 = vmatpush1.msra.mxu0 0.0
  %269 = vmatprep.subr.mxu0 0.0
  %270 = vmatpush1.msra.mxu0 0.0
  %271 = vmatprep.subr.mxu0 0.0
  %272 = vmatpush1.msra.mxu0 0.0
  %273 = vmatprep.subr.mxu0 0.0
  %274 = vmatpush1.msra.mxu0 0.0
  %275 = vmatprep.subr.mxu0 0.0
  %276 = vmatpush1.msra.mxu0 0.0
  %277 = vmatprep.subr.mxu0 0.0
  %278 = vmatpush1.msra.mxu0 0.0
  %279 = vmatprep.subr.mxu0 0.0
  %280 = vmatpush1.msra.mxu0 0.0
  %281 = vmatprep.subr.mxu0 0.0
  %282 = vmatpush1.msra.mxu0 0.0
  %283 = vmatprep.subr.mxu0 0.0
  %284 = vmatpush1.msra.mxu0 0.0
  %285 = vmatprep.subr.mxu0 0.0
  %286 = vmatpush1.msra.mxu0 0.0
  %287 = vmatprep.subr.mxu0 0.0
  %288 = vmatpush1.msra.mxu0 0.0
  %289 = vmatprep.subr.mxu0 0.0
  %290 = vmatpush1.msra.mxu0 0.0
  %291 = vmatprep.subr.mxu0 0.0
  %292 = vmatpush1.msra.mxu0 0.0
  %293 = vmatprep.subr.mxu0 0.0
  %294 = vmatpush1.msra.mxu0 0.0
  %295 = vmatprep.subr.mxu0 0.0
  %296 = vmatpush1.msra.mxu0 0.0
  %297 = vmatprep.mubr.f32.mxu0 0.0
  %298 = vmatmul.mubr.f32.gmra.mrb[0].mxu0 %v231
  %v299 = vpop.f32.mrb[0].mxu0
  %v300 = vadd.f32 0.0, %v299
  %v301 = vpop.f32.mrb[0].mxu0
  %302 = vdwg.mxu0
  %v303 = vadd.f32 %v230, %v300
  %v304 = vxor.u32 %v303, 2147483648
  %v305 = vmul.f32 %v304, 1.442695
  %v306 = vpow.pop %v305
  %v307 = vadd.f32 %v306, 1.0
  %v308 = vrcp.pop %v307
  %v309 = vmul.f32 1.0, %v308
  %v310 = vtanh.pop %v303
  %v311 = vmul.f32 %v309, %v216
  %313 = vrot.lane.b32.xlu0 %v310, 64
  %v314 = vpop.permute.xlu0 %313
  %v316 = vmul.f32 %v309, %v314
  %318 = vrot.lane.b32.xlu0 %v316, 32
  %v319 = vpop.permute.xlu0 %318
  %v321 = vadd.f32 %v311, %v319
  %v322 = vtanh.pop %v321
  %324 = vrot.lane.b32.xlu0 %v322, 64
  %v325 = vpop.permute.xlu0 %324
  %v327 = vmul.f32 %v309, %v325
  %329 = vrot.lane.b32.xlu0 %v327, 32
  %v330 = vpop.permute.xlu0 %329
  %s332 = scalar_lea.vmem [#allocation3], 2
  %333 = vst.msk [vmem:[%s332] sm:$0x3] %vm227, %v330
  %s334 = scalar_lea.vmem [#allocation2], 4
  %v335 = vld [vmem:[%s334] sm:$0x3]
  %v336 = vsel %vm36, %v330, 0
  %338 = vmatprep.subr.mxu0 0.0
  %339 = vmatpush1.msra.mxu0 %v120
  %340 = vmatprep.subr.mxu0 0.0
  %341 = vmatpush1.msra.mxu0 %v121
  %342 = vmatprep.subr.mxu0 0.0
  %343 = vmatpush1.msra.mxu0 %v122
  %344 = vmatprep.subr.mxu0 0.0
  %345 = vmatpush1.msra.mxu0 %v123
  %346 = vmatprep.subr.mxu0 0.0
  %347 = vmatpush1.msra.mxu0 0.0
  %348 = vmatprep.subr.mxu0 0.0
  %349 = vmatpush1.msra.mxu0 0.0
  %350 = vmatprep.subr.mxu0 0.0
  %351 = vmatpush1.msra.mxu0 0.0
  %352 = vmatprep.subr.mxu0 0.0
  %353 = vmatpush1.msra.mxu0 0.0
  %354 = vmatprep.subr.mxu0 0.0
  %355 = vmatpush1.msra.mxu0 0.0
  %356 = vmatprep.subr.mxu0 0.0
  %357 = vmatpush1.msra.mxu0 0.0
  %358 = vmatprep.subr.mxu0 0.0
  %359 = vmatpush1.msra.mxu0 0.0
  %360 = vmatprep.subr.mxu0 0.0
  %361 = vmatpush1.msra.mxu0 0.0
  %362 = vmatprep.subr.mxu0 0.0
  %363 = vmatpush1.msra.mxu0 0.0
  %364 = vmatprep.subr.mxu0 0.0
  %365 = vmatpush1.msra.mxu0 0.0
  %366 = vmatprep.subr.mxu0 0.0
  %367 = vmatpush1.msra.mxu0 0.0
  %368 = vmatprep.subr.mxu0 0.0
  %369 = vmatpush1.msra.mxu0 0.0
  %370 = vmatprep.subr.mxu0 0.0
  %371 = vmatpush1.msra.mxu0 0.0
  %372 = vmatprep.subr.mxu0 0.0
  %373 = vmatpush1.msra.mxu0 0.0
  %374 = vmatprep.subr.mxu0 0.0
  %375 = vmatpush1.msra.mxu0 0.0
  %376 = vmatprep.subr.mxu0 0.0
  %377 = vmatpush1.msra.mxu0 0.0
  %378 = vmatprep.subr.mxu0 0.0
  %379 = vmatpush1.msra.mxu0 0.0
  %380 = vmatprep.subr.mxu0 0.0
  %381 = vmatpush1.msra.mxu0 0.0
  %382 = vmatprep.subr.mxu0 0.0
  %383 = vmatpush1.msra.mxu0 0.0
  %384 = vmatprep.subr.mxu0 0.0
  %385 = vmatpush1.msra.mxu0 0.0
  %386 = vmatprep.subr.mxu0 0.0
  %387 = vmatpush1.msra.mxu0 0.0
  %388 = vmatprep.subr.mxu0 0.0
  %389 = vmatpush1.msra.mxu0 0.0
  %390 = vmatprep.subr.mxu0 0.0
  %391 = vmatpush1.msra.mxu0 0.0
  %392 = vmatprep.subr.mxu0 0.0
  %393 = vmatpush1.msra.mxu0 0.0
  %394 = vmatprep.subr.mxu0 0.0
  %395 = vmatpush1.msra.mxu0 0.0
  %396 = vmatprep.subr.mxu0 0.0
  %397 = vmatpush1.msra.mxu0 0.0
  %398 = vmatprep.subr.mxu0 0.0
  %399 = vmatpush1.msra.mxu0 0.0
  %400 = vmatprep.subr.mxu0 0.0
  %401 = vmatpush1.msra.mxu0 0.0
  %402 = vmatprep.mubr.f32.mxu0 0.0
  %403 = vmatmul.mubr.f32.gmra.mrb[0].mxu0 %v336
  %v404 = vpop.f32.mrb[0].mxu0
  %v405 = vadd.f32 0.0, %v404
  %v406 = vpop.f32.mrb[0].mxu0
  %407 = vdwg.mxu0
  %v408 = vadd.f32 %v335, %v405
  %v409 = vxor.u32 %v408, 2147483648
  %v410 = vmul.f32 %v409, 1.442695
  %v411 = vpow.pop %v410
  %v412 = vadd.f32 %v411, 1.0
  %v413 = vrcp.pop %v412
  %v414 = vmul.f32 1.0, %v413
  %v415 = vtanh.pop %v408
  %v416 = vmul.f32 %v414, %v321
  %418 = vrot.lane.b32.xlu0 %v415, 64
  %v419 = vpop.permute.xlu0 %418
  %v421 = vmul.f32 %v414, %v419
  %423 = vrot.lane.b32.xlu0 %v421, 32
  %v424 = vpop.permute.xlu0 %423
  %v426 = vadd.f32 %v416, %v424
  %v427 = vtanh.pop %v426
  %429 = vrot.lane.b32.xlu0 %v427, 64
  %v430 = vpop.permute.xlu0 %429
  %v432 = vmul.f32 %v414, %v430
  %434 = vrot.lane.b32.xlu0 %v432, 32
  %v435 = vpop.permute.xlu0 %434
  %s437 = scalar_lea.vmem [#allocation3], 4
  %438 = vst.msk [vmem:[%s437] sm:$0x3] %vm227, %v435
  %s439 = scalar_lea.vmem [#allocation2], 6
  %v440 = vld [vmem:[%s439] sm:$0x3]
  %v441 = vsel %vm36, %v435, 0
  %443 = vmatprep.subr.mxu0 0.0
  %444 = vmatpush1.msra.mxu0 %v120
  %445 = vmatprep.subr.mxu0 0.0
  %446 = vmatpush1.msra.mxu0 %v121
  %447 = vmatprep.subr.mxu0 0.0
  %448 = vmatpush1.msra.mxu0 %v122
  %449 = vmatprep.subr.mxu0 0.0
  %450 = vmatpush1.msra.mxu0 %v123
  %451 = vmatprep.subr.mxu0 0.0
  %452 = vmatpush1.msra.mxu0 0.0
  %453 = vmatprep.subr.mxu0 0.0
  %454 = vmatpush1.msra.mxu0 0.0
  %455 = vmatprep.subr.mxu0 0.0
  %456 = vmatpush1.msra.mxu0 0.0
  %457 = vmatprep.subr.mxu0 0.0
  %458 = vmatpush1.msra.mxu0 0.0
  %459 = vmatprep.subr.mxu0 0.0
  %460 = vmatpush1.msra.mxu0 0.0
  %461 = vmatprep.subr.mxu0 0.0
  %462 = vmatpush1.msra.mxu0 0.0
  %463 = vmatprep.subr.mxu0 0.0
  %464 = vmatpush1.msra.mxu0 0.0
  %465 = vmatprep.subr.mxu0 0.0
  %466 = vmatpush1.msra.mxu0 0.0
  %467 = vmatprep.subr.mxu0 0.0
  %468 = vmatpush1.msra.mxu0 0.0
  %469 = vmatprep.subr.mxu0 0.0
  %470 = vmatpush1.msra.mxu0 0.0
  %471 = vmatprep.subr.mxu0 0.0
  %472 = vmatpush1.msra.mxu0 0.0
  %473 = vmatprep.subr.mxu0 0.0
  %474 = vmatpush1.msra.mxu0 0.0
  %475 = vmatprep.subr.mxu0 0.0
  %476 = vmatpush1.msra.mxu0 0.0
  %477 = vmatprep.subr.mxu0 0.0
  %478 = vmatpush1.msra.mxu0 0.0
  %479 = vmatprep.subr.mxu0 0.0
  %480 = vmatpush1.msra.mxu0 0.0
  %481 = vmatprep.subr.mxu0 0.0
  %482 = vmatpush1.msra.mxu0 0.0
  %483 = vmatprep.subr.mxu0 0.0
  %484 = vmatpush1.msra.mxu0 0.0
  %485 = vmatprep.subr.mxu0 0.0
  %486 = vmatpush1.msra.mxu0 0.0
  %487 = vmatprep.subr.mxu0 0.0
  %488 = vmatpush1.msra.mxu0 0.0
  %489 = vmatprep.subr.mxu0 0.0
  %490 = vmatpush1.msra.mxu0 0.0
  %491 = vmatprep.subr.mxu0 0.0
  %492 = vmatpush1.msra.mxu0 0.0
  %493 = vmatprep.subr.mxu0 0.0
  %494 = vmatpush1.msra.mxu0 0.0
  %495 = vmatprep.subr.mxu0 0.0
  %496 = vmatpush1.msra.mxu0 0.0
  %497 = vmatprep.subr.mxu0 0.0
  %498 = vmatpush1.msra.mxu0 0.0
  %499 = vmatprep.subr.mxu0 0.0
  %500 = vmatpush1.msra.mxu0 0.0
  %501 = vmatprep.subr.mxu0 0.0
  %502 = vmatpush1.msra.mxu0 0.0
  %503 = vmatprep.subr.mxu0 0.0
  %504 = vmatpush1.msra.mxu0 0.0
  %505 = vmatprep.subr.mxu0 0.0
  %506 = vmatpush1.msra.mxu0 0.0
  %507 = vmatprep.mubr.f32.mxu0 0.0
  %508 = vmatmul.mubr.f32.gmra.mrb[0].mxu0 %v441
  %v509 = vpop.f32.mrb[0].mxu0
  %v510 = vadd.f32 0.0, %v509
  %v511 = vpop.f32.mrb[0].mxu0
  %512 = vdwg.mxu0
  %v513 = vadd.f32 %v440, %v510
  %v514 = vxor.u32 %v513, 2147483648
  %v515 = vmul.f32 %v514, 1.442695
  %v516 = vpow.pop %v515
  %v517 = vadd.f32 %v516, 1.0
  %v518 = vrcp.pop %v517
  %v519 = vmul.f32 1.0, %v518
  %v520 = vtanh.pop %v513
  %v521 = vmul.f32 %v519, %v426
  %523 = vrot.lane.b32.xlu0 %v520, 64
  %v524 = vpop.permute.xlu0 %523
  %v526 = vmul.f32 %v519, %v524
  %528 = vrot.lane.b32.xlu0 %v526, 32
  %v529 = vpop.permute.xlu0 %528
  %v531 = vadd.f32 %v521, %v529
  %v532 = vtanh.pop %v531
  %534 = vrot.lane.b32.xlu0 %v532, 64
  %v535 = vpop.permute.xlu0 %534
  %v537 = vmul.f32 %v519, %v535
  %539 = vrot.lane.b32.xlu0 %v537, 32
  %v540 = vpop.permute.xlu0 %539
  %s542 = scalar_lea.vmem [#allocation3], 6
  %543 = vst.msk [vmem:[%s542] sm:$0x3] %vm227, %v540
  %s544 = scalar_lea.vmem [#allocation2], 8
  %v545 = vld [vmem:[%s544] sm:$0x3]
  %v546 = vsel %vm36, %v540, 0
  %548 = vmatprep.subr.mxu0 0.0
  %549 = vmatpush1.msra.mxu0 %v120
  %550 = vmatprep.subr.mxu0 0.0
  %551 = vmatpush1.msra.mxu0 %v121
  %552 = vmatprep.subr.mxu0 0.0
  %553 = vmatpush1.msra.mxu0 %v122
  %554 = vmatprep.subr.mxu0 0.0
  %555 = vmatpush1.msra.mxu0 %v123
  %556 = vmatprep.subr.mxu0 0.0
  %557 = vmatpush1.msra.mxu0 0.0
  %558 = vmatprep.subr.mxu0 0.0
  %559 = vmatpush1.msra.mxu0 0.0
  %560 = vmatprep.subr.mxu0 0.0
  %561 = vmatpush1.msra.mxu0 0.0
  %562 = vmatprep.subr.mxu0 0.0
  %563 = vmatpush1.msra.mxu0 0.0
  %564 = vmatprep.subr.mxu0 0.0
  %565 = vmatpush1.msra.mxu0 0.0
  %566 = vmatprep.subr.mxu0 0.0
  %567 = vmatpush1.msra.mxu0 0.0
  %568 = vmatprep.subr.mxu0 0.0
  %569 = vmatpush1.msra.mxu0 0.0
  %570 = vmatprep.subr.mxu0 0.0
  %571 = vmatpush1.msra.mxu0 0.0
  %572 = vmatprep.subr.mxu0 0.0
  %573 = vmatpush1.msra.mxu0 0.0
  %574 = vmatprep.subr.mxu0 0.0
  %575 = vmatpush1.msra.mxu0 0.0
  %576 = vmatprep.subr.mxu0 0.0
  %577 = vmatpush1.msra.mxu0 0.0
  %578 = vmatprep.subr.mxu0 0.0
  %579 = vmatpush1.msra.mxu0 0.0
  %580 = vmatprep.subr.mxu0 0.0
  %581 = vmatpush1.msra.mxu0 0.0
  %582 = vmatprep.subr.mxu0 0.0
  %583 = vmatpush1.msra.mxu0 0.0
  %584 = vmatprep.subr.mxu0 0.0
  %585 = vmatpush1.msra.mxu0 0.0
  %586 = vmatprep.subr.mxu0 0.0
  %587 = vmatpush1.msra.mxu0 0.0
  %588 = vmatprep.subr.mxu0 0.0
  %589 = vmatpush1.msra.mxu0 0.0
  %590 = vmatprep.subr.mxu0 0.0
  %591 = vmatpush1.msra.mxu0 0.0
  %592 = vmatprep.subr.mxu0 0.0
  %593 = vmatpush1.msra.mxu0 0.0
  %594 = vmatprep.subr.mxu0 0.0
  %595 = vmatpush1.msra.mxu0 0.0
  %596 = vmatprep.subr.mxu0 0.0
  %597 = vmatpush1.msra.mxu0 0.0
  %598 = vmatprep.subr.mxu0 0.0
  %599 = vmatpush1.msra.mxu0 0.0
  %600 = vmatprep.subr.mxu0 0.0
  %601 = vmatpush1.msra.mxu0 0.0
  %602 = vmatprep.subr.mxu0 0.0
  %603 = vmatpush1.msra.mxu0 0.0
  %604 = vmatprep.subr.mxu0 0.0
  %605 = vmatpush1.msra.mxu0 0.0
  %606 = vmatprep.subr.mxu0 0.0
  %607 = vmatpush1.msra.mxu0 0.0
  %608 = vmatprep.subr.mxu0 0.0
  %609 = vmatpush1.msra.mxu0 0.0
  %610 = vmatprep.subr.mxu0 0.0
  %611 = vmatpush1.msra.mxu0 0.0
  %612 = vmatprep.mubr.f32.mxu0 0.0
  %613 = vmatmul.mubr.f32.gmra.mrb[0].mxu0 %v546
  %v614 = vpop.f32.mrb[0].mxu0
  %v615 = vadd.f32 0.0, %v614
  %v616 = vpop.f32.mrb[0].mxu0
  %617 = vdwg.mxu0
  %v618 = vadd.f32 %v545, %v615
  %v619 = vxor.u32 %v618, 2147483648
  %v620 = vmul.f32 %v619, 1.442695
  %v621 = vpow.pop %v620
  %v622 = vadd.f32 %v621, 1.0
  %v623 = vrcp.pop %v622
  %v624 = vmul.f32 1.0, %v623
  %v625 = vtanh.pop %v618
  %v626 = vmul.f32 %v624, %v531
  %628 = vrot.lane.b32.xlu0 %v625, 64
  %v629 = vpop.permute.xlu0 %628
  %v631 = vmul.f32 %v624, %v629
  %633 = vrot.lane.b32.xlu0 %v631, 32
  %v634 = vpop.permute.xlu0 %633
  %v636 = vadd.f32 %v626, %v634
  %v637 = vtanh.pop %v636
  %639 = vrot.lane.b32.xlu0 %v637, 64
  %v640 = vpop.permute.xlu0 %639
  %v642 = vmul.f32 %v624, %v640
  %644 = vrot.lane.b32.xlu0 %v642, 32
  %v645 = vpop.permute.xlu0 %644
  %s647 = scalar_lea.vmem [#allocation3], 8
  %648 = vst.msk [vmem:[%s647] sm:$0x3] %vm227, %v645
  %s649 = scalar_lea.vmem [#allocation2], 10
  %v650 = vld [vmem:[%s649] sm:$0x3]
  %v651 = vsel %vm36, %v645, 0
  %653 = vmatprep.subr.mxu0 0.0
  %654 = vmatpush1.msra.mxu0 %v120
  %655 = vmatprep.subr.mxu0 0.0
  %656 = vmatpush1.msra.mxu0 %v121
  %657 = vmatprep.subr.mxu0 0.0
  %658 = vmatpush1.msra.mxu0 %v122
  %659 = vmatprep.subr.mxu0 0.0
  %660 = vmatpush1.msra.mxu0 %v123
  %661 = vmatprep.subr.mxu0 0.0
  %662 = vmatpush1.msra.mxu0 0.0
  %663 = vmatprep.subr.mxu0 0.0
  %664 = vmatpush1.msra.mxu0 0.0
  %665 = vmatprep.subr.mxu0 0.0
  %666 = vmatpush1.msra.mxu0 0.0
  %667 = vmatprep.subr.mxu0 0.0
  %668 = vmatpush1.msra.mxu0 0.0
  %669 = vmatprep.subr.mxu0 0.0
  %670 = vmatpush1.msra.mxu0 0.0
  %671 = vmatprep.subr.mxu0 0.0
  %672 = vmatpush1.msra.mxu0 0.0
  %673 = vmatprep.subr.mxu0 0.0
  %674 = vmatpush1.msra.mxu0 0.0
  %675 = vmatprep.subr.mxu0 0.0
  %676 = vmatpush1.msra.mxu0 0.0
  %677 = vmatprep.subr.mxu0 0.0
  %678 = vmatpush1.msra.mxu0 0.0
  %679 = vmatprep.subr.mxu0 0.0
  %680 = vmatpush1.msra.mxu0 0.0
  %681 = vmatprep.subr.mxu0 0.0
  %682 = vmatpush1.msra.mxu0 0.0
  %683 = vmatprep.subr.mxu0 0.0
  %684 = vmatpush1.msra.mxu0 0.0
  %685 = vmatprep.subr.mxu0 0.0
  %686 = vmatpush1.msra.mxu0 0.0
  %687 = vmatprep.subr.mxu0 0.0
  %688 = vmatpush1.msra.mxu0 0.0
  %689 = vmatprep.subr.mxu0 0.0
  %690 = vmatpush1.msra.mxu0 0.0
  %691 = vmatprep.subr.mxu0 0.0
  %692 = vmatpush1.msra.mxu0 0.0
  %693 = vmatprep.subr.mxu0 0.0
  %694 = vmatpush1.msra.mxu0 0.0
  %695 = vmatprep.subr.mxu0 0.0
  %696 = vmatpush1.msra.mxu0 0.0
  %697 = vmatprep.subr.mxu0 0.0
  %698 = vmatpush1.msra.mxu0 0.0
  %699 = vmatprep.subr.mxu0 0.0
  %700 = vmatpush1.msra.mxu0 0.0
  %701 = vmatprep.subr.mxu0 0.0
  %702 = vmatpush1.msra.mxu0 0.0
  %703 = vmatprep.subr.mxu0 0.0
  %704 = vmatpush1.msra.mxu0 0.0
  %705 = vmatprep.subr.mxu0 0.0
  %706 = vmatpush1.msra.mxu0 0.0
  %707 = vmatprep.subr.mxu0 0.0
  %708 = vmatpush1.msra.mxu0 0.0
  %709 = vmatprep.subr.mxu0 0.0
  %710 = vmatpush1.msra.mxu0 0.0
  %711 = vmatprep.subr.mxu0 0.0
  %712 = vmatpush1.msra.mxu0 0.0
  %713 = vmatprep.subr.mxu0 0.0
  %714 = vmatpush1.msra.mxu0 0.0
  %715 = vmatprep.subr.mxu0 0.0
  %716 = vmatpush1.msra.mxu0 0.0
  %717 = vmatprep.mubr.f32.mxu0 0.0
  %718 = vmatmul.mubr.f32.gmra.mrb[0].mxu0 %v651
  %v719 = vpop.f32.mrb[0].mxu0
  %v720 = vadd.f32 0.0, %v719
  %v721 = vpop.f32.mrb[0].mxu0
  %722 = vdwg.mxu0
  %v723 = vadd.f32 %v650, %v720
  %v724 = vxor.u32 %v723, 2147483648
  %v725 = vmul.f32 %v724, 1.442695
  %v726 = vpow.pop %v725
  %v727 = vadd.f32 %v726, 1.0
  %v728 = vrcp.pop %v727
  %v729 = vmul.f32 1.0, %v728
  %v730 = vtanh.pop %v723
  %v731 = vmul.f32 %v729, %v636
  %733 = vrot.lane.b32.xlu0 %v730, 64
  %v734 = vpop.permute.xlu0 %733
  %v736 = vmul.f32 %v729, %v734
  %738 = vrot.lane.b32.xlu0 %v736, 32
  %v739 = vpop.permute.xlu0 %738
  %v741 = vadd.f32 %v731, %v739
  %v742 = vtanh.pop %v741
  %744 = vrot.lane.b32.xlu0 %v742, 64
  %v745 = vpop.permute.xlu0 %744
  %v747 = vmul.f32 %v729, %v745
  %749 = vrot.lane.b32.xlu0 %v747, 32
  %v750 = vpop.permute.xlu0 %749
  %s752 = scalar_lea.vmem [#allocation3], 10
  %753 = vst.msk [vmem:[%s752] sm:$0x3] %vm227, %v750
  %s754 = scalar_lea.vmem [#allocation2], 12
  %v755 = vld [vmem:[%s754] sm:$0x3]
  %v756 = vsel %vm36, %v750, 0
  %758 = vmatprep.subr.mxu0 0.0
  %759 = vmatpush1.msra.mxu0 %v120
  %760 = vmatprep.subr.mxu0 0.0
  %761 = vmatpush1.msra.mxu0 %v121
  %762 = vmatprep.subr.mxu0 0.0
  %763 = vmatpush1.msra.mxu0 %v122
  %764 = vmatprep.subr.mxu0 0.0
  %765 = vmatpush1.msra.mxu0 %v123
  %766 = vmatprep.subr.mxu0 0.0
  %767 = vmatpush1.msra.mxu0 0.0
  %768 = vmatprep.subr.mxu0 0.0
  %769 = vmatpush1.msra.mxu0 0.0
  %770 = vmatprep.subr.mxu0 0.0
  %771 = vmatpush1.msra.mxu0 0.0
  %772 = vmatprep.subr.mxu0 0.0
  %773 = vmatpush1.msra.mxu0 0.0
  %774 = vmatprep.subr.mxu0 0.0
  %775 = vmatpush1.msra.mxu0 0.0
  %776 = vmatprep.subr.mxu0 0.0
  %777 = vmatpush1.msra.mxu0 0.0
  %778 = vmatprep.subr.mxu0 0.0
  %779 = vmatpush1.msra.mxu0 0.0
  %780 = vmatprep.subr.mxu0 0.0
  %781 = vmatpush1.msra.mxu0 0.0
  %782 = vmatprep.subr.mxu0 0.0
  %783 = vmatpush1.msra.mxu0 0.0
  %784 = vmatprep.subr.mxu0 0.0
  %785 = vmatpush1.msra.mxu0 0.0
  %786 = vmatprep.subr.mxu0 0.0
  %787 = vmatpush1.msra.mxu0 0.0
  %788 = vmatprep.subr.mxu0 0.0
  %789 = vmatpush1.msra.mxu0 0.0
  %790 = vmatprep.subr.mxu0 0.0
  %791 = vmatpush1.msra.mxu0 0.0
  %792 = vmatprep.subr.mxu0 0.0
  %793 = vmatpush1.msra.mxu0 0.0
  %794 = vmatprep.subr.mxu0 0.0
  %795 = vmatpush1.msra.mxu0 0.0
  %796 = vmatprep.subr.mxu0 0.0
  %797 = vmatpush1.msra.mxu0 0.0
  %798 = vmatprep.subr.mxu0 0.0
  %799 = vmatpush1.msra.mxu0 0.0
  %800 = vmatprep.subr.mxu0 0.0
  %801 = vmatpush1.msra.mxu0 0.0
  %802 = vmatprep.subr.mxu0 0.0
  %803 = vmatpush1.msra.mxu0 0.0
  %804 = vmatprep.subr.mxu0 0.0
  %805 = vmatpush1.msra.mxu0 0.0
  %806 = vmatprep.subr.mxu0 0.0
  %807 = vmatpush1.msra.mxu0 0.0
  %808 = vmatprep.subr.mxu0 0.0
  %809 = vmatpush1.msra.mxu0 0.0
  %810 = vmatprep.subr.mxu0 0.0
  %811 = vmatpush1.msra.mxu0 0.0
  %812 = vmatprep.subr.mxu0 0.0
  %813 = vmatpush1.msra.mxu0 0.0
  %814 = vmatprep.subr.mxu0 0.0
  %815 = vmatpush1.msra.mxu0 0.0
  %816 = vmatprep.subr.mxu0 0.0
  %817 = vmatpush1.msra.mxu0 0.0
  %818 = vmatprep.subr.mxu0 0.0
  %819 = vmatpush1.msra.mxu0 0.0
  %820 = vmatprep.subr.mxu0 0.0
  %821 = vmatpush1.msra.mxu0 0.0
  %822 = vmatprep.mubr.f32.mxu0 0.0
  %823 = vmatmul.mubr.f32.gmra.mrb[0].mxu0 %v756
  %v824 = vpop.f32.mrb[0].mxu0
  %v825 = vadd.f32 0.0, %v824
  %v826 = vpop.f32.mrb[0].mxu0
  %827 = vdwg.mxu0
  %v828 = vadd.f32 %v755, %v825
  %v829 = vxor.u32 %v828, 2147483648
  %v830 = vmul.f32 %v829, 1.442695
  %v831 = vpow.pop %v830
  %v832 = vadd.f32 %v831, 1.0
  %v833 = vrcp.pop %v832
  %v834 = vmul.f32 1.0, %v833
  %v835 = vtanh.pop %v828
  %v836 = vmul.f32 %v834, %v741
  %838 = vrot.lane.b32.xlu0 %v835, 64
  %v839 = vpop.permute.xlu0 %838
  %v841 = vmul.f32 %v834, %v839
  %843 = vrot.lane.b32.xlu0 %v841, 32
  %v844 = vpop.permute.xlu0 %843
  %v846 = vadd.f32 %v836, %v844
  %v847 = vtanh.pop %v846
  %849 = vrot.lane.b32.xlu0 %v847, 64
  %v850 = vpop.permute.xlu0 %849
  %v852 = vmul.f32 %v834, %v850
  %854 = vrot.lane.b32.xlu0 %v852, 32
  %v855 = vpop.permute.xlu0 %854
  %s857 = scalar_lea.vmem [#allocation3], 12
  %858 = vst.msk [vmem:[%s857] sm:$0x3] %vm227, %v855
  %s859 = scalar_lea.vmem [#allocation2], 14
  %v860 = vld [vmem:[%s859] sm:$0x3]
  %v861 = vsel %vm36, %v855, 0
  %863 = vmatprep.subr.mxu0 0.0
  %864 = vmatpush1.msra.mxu0 %v120
  %865 = vmatprep.subr.mxu0 0.0
  %866 = vmatpush1.msra.mxu0 %v121
  %867 = vmatprep.subr.mxu0 0.0
  %868 = vmatpush1.msra.mxu0 %v122
  %869 = vmatprep.subr.mxu0 0.0
  %870 = vmatpush1.msra.mxu0 %v123
  %871 = vmatprep.subr.mxu0 0.0
  %872 = vmatpush1.msra.mxu0 0.0
  %873 = vmatprep.subr.mxu0 0.0
  %874 = vmatpush1.msra.mxu0 0.0
  %875 = vmatprep.subr.mxu0 0.0
  %876 = vmatpush1.msra.mxu0 0.0
  %877 = vmatprep.subr.mxu0 0.0
  %878 = vmatpush1.msra.mxu0 0.0
  %879 = vmatprep.subr.mxu0 0.0
  %880 = vmatpush1.msra.mxu0 0.0
  %881 = vmatprep.subr.mxu0 0.0
  %882 = vmatpush1.msra.mxu0 0.0
  %883 = vmatprep.subr.mxu0 0.0
  %884 = vmatpush1.msra.mxu0 0.0
  %885 = vmatprep.subr.mxu0 0.0
  %886 = vmatpush1.msra.mxu0 0.0
  %887 = vmatprep.subr.mxu0 0.0
  %888 = vmatpush1.msra.mxu0 0.0
  %889 = vmatprep.subr.mxu0 0.0
  %890 = vmatpush1.msra.mxu0 0.0
  %891 = vmatprep.subr.mxu0 0.0
  %892 = vmatpush1.msra.mxu0 0.0
  %893 = vmatprep.subr.mxu0 0.0
  %894 = vmatpush1.msra.mxu0 0.0
  %895 = vmatprep.subr.mxu0 0.0
  %896 = vmatpush1.msra.mxu0 0.0
  %897 = vmatprep.subr.mxu0 0.0
  %898 = vmatpush1.msra.mxu0 0.0
  %899 = vmatprep.subr.mxu0 0.0
  %900 = vmatpush1.msra.mxu0 0.0
  %901 = vmatprep.subr.mxu0 0.0
  %902 = vmatpush1.msra.mxu0 0.0
  %903 = vmatprep.subr.mxu0 0.0
  %904 = vmatpush1.msra.mxu0 0.0
  %905 = vmatprep.subr.mxu0 0.0
  %906 = vmatpush1.msra.mxu0 0.0
  %907 = vmatprep.subr.mxu0 0.0
  %908 = vmatpush1.msra.mxu0 0.0
  %909 = vmatprep.subr.mxu0 0.0
  %910 = vmatpush1.msra.mxu0 0.0
  %911 = vmatprep.subr.mxu0 0.0
  %912 = vmatpush1.msra.mxu0 0.0
  %913 = vmatprep.subr.mxu0 0.0
  %914 = vmatpush1.msra.mxu0 0.0
  %915 = vmatprep.subr.mxu0 0.0
  %916 = vmatpush1.msra.mxu0 0.0
  %917 = vmatprep.subr.mxu0 0.0
  %918 = vmatpush1.msra.mxu0 0.0
  %919 = vmatprep.subr.mxu0 0.0
  %920 = vmatpush1.msra.mxu0 0.0
  %921 = vmatprep.subr.mxu0 0.0
  %922 = vmatpush1.msra.mxu0 0.0
  %923 = vmatprep.subr.mxu0 0.0
  %924 = vmatpush1.msra.mxu0 0.0
  %925 = vmatprep.subr.mxu0 0.0
  %926 = vmatpush1.msra.mxu0 0.0
  %927 = vmatprep.mubr.f32.mxu0 0.0
  %928 = vmatmul.mubr.f32.gmra.mrb[0].mxu0 %v861
  %v929 = vpop.f32.mrb[0].mxu0
  %v930 = vadd.f32 0.0, %v929
  %v931 = vpop.f32.mrb[0].mxu0
  %932 = vdwg.mxu0
  %v933 = vadd.f32 %v860, %v930
  %v934 = vxor.u32 %v933, 2147483648
  %v935 = vmul.f32 %v934, 1.442695
  %v936 = vpow.pop %v935
  %v937 = vadd.f32 %v936, 1.0
  %v938 = vrcp.pop %v937
  %v939 = vmul.f32 1.0, %v938
  %v940 = vtanh.pop %v933
  %v941 = vmul.f32 %v939, %v846
  %943 = vrot.lane.b32.xlu0 %v940, 64
  %v944 = vpop.permute.xlu0 %943
  %v946 = vmul.f32 %v939, %v944
  %948 = vrot.lane.b32.xlu0 %v946, 32
  %v949 = vpop.permute.xlu0 %948
  %v951 = vadd.f32 %v941, %v949
  %v952 = vtanh.pop %v951
  %954 = vrot.lane.b32.xlu0 %v952, 64
  %v955 = vpop.permute.xlu0 %954
  %v957 = vmul.f32 %v939, %v955
  %959 = vrot.lane.b32.xlu0 %v957, 32
  %v960 = vpop.permute.xlu0 %959
  %s962 = scalar_lea.vmem [#allocation3], 14
  %963 = vst.msk [vmem:[%s962] sm:$0x3] %vm227, %v960
  %v964 = vld [vmem:[#allocation3] sm:$0xff]
  %v965 = vld [vmem:[#allocation3 + $0x8] sm:$0xff]
  %v966 = vld [vmem:[%s4] sm:$0xff]
  %v967 = vld [vmem:[%s4 + $0x8] sm:$0xff]
  %v968 = vld [vmem:[%s4 + $0x10] sm:$0xff]
  %v969 = vld [vmem:[%s4 + $0x18] sm:$0xff]
  %v970 = vld [vmem:[%s5] sm:$0x1]
  %v972 = vlaneseq
  %v973 = vshrl.u32 %v972, 7
  %v974 = vsub.s32 0, %v973
  %v975 = vrot.slane %v970, %v974
  %v978 = vsel %vm36, %v964, 0
  %v981 = vsel %vm36, %v965, 0
  %983 = vmatprep.subr.mxu0 0.0
  %984 = vmatpush1.msra.mxu0 %v966
  %985 = vmatprep.subr.mxu0 0.0
  %986 = vmatpush1.msra.mxu0 %v967
  %987 = vmatprep.subr.mxu0 0.0
  %988 = vmatpush1.msra.mxu0 %v968
  %989 = vmatprep.subr.mxu0 0.0
  %990 = vmatpush1.msra.mxu0 %v969
  %991 = vmatprep.subr.mxu0 0.0
  %992 = vmatpush1.msra.mxu0 0.0
  %993 = vmatprep.subr.mxu0 0.0
  %994 = vmatpush1.msra.mxu0 0.0
  %995 = vmatprep.subr.mxu0 0.0
  %996 = vmatpush1.msra.mxu0 0.0
  %997 = vmatprep.subr.mxu0 0.0
  %998 = vmatpush1.msra.mxu0 0.0
  %999 = vmatprep.subr.mxu0 0.0
  %1000 = vmatpush1.msra.mxu0 0.0
  %1001 = vmatprep.subr.mxu0 0.0
  %1002 = vmatpush1.msra.mxu0 0.0
  %1003 = vmatprep.subr.mxu0 0.0
  %1004 = vmatpush1.msra.mxu0 0.0
  %1005 = vmatprep.subr.mxu0 0.0
  %1006 = vmatpush1.msra.mxu0 0.0
  %1007 = vmatprep.subr.mxu0 0.0
  %1008 = vmatpush1.msra.mxu0 0.0
  %1009 = vmatprep.subr.mxu0 0.0
  %1010 = vmatpush1.msra.mxu0 0.0
  %1011 = vmatprep.subr.mxu0 0.0
  %1012 = vmatpush1.msra.mxu0 0.0
  %1013 = vmatprep.subr.mxu0 0.0
  %1014 = vmatpush1.msra.mxu0 0.0
  %1015 = vmatprep.subr.mxu0 0.0
  %1016 = vmatpush1.msra.mxu0 0.0
  %1017 = vmatprep.subr.mxu0 0.0
  %1018 = vmatpush1.msra.mxu0 0.0
  %1019 = vmatprep.subr.mxu0 0.0
  %1020 = vmatpush1.msra.mxu0 0.0
  %1021 = vmatprep.subr.mxu0 0.0
  %1022 = vmatpush1.msra.mxu0 0.0
  %1023 = vmatprep.subr.mxu0 0.0
  %1024 = vmatpush1.msra.mxu0 0.0
  %1025 = vmatprep.subr.mxu0 0.0
  %1026 = vmatpush1.msra.mxu0 0.0
  %1027 = vmatprep.subr.mxu0 0.0
  %1028 = vmatpush1.msra.mxu0 0.0
  %1029 = vmatprep.subr.mxu0 0.0
  %1030 = vmatpush1.msra.mxu0 0.0
  %1031 = vmatprep.subr.mxu0 0.0
  %1032 = vmatpush1.msra.mxu0 0.0
  %1033 = vmatprep.subr.mxu0 0.0
  %1034 = vmatpush1.msra.mxu0 0.0
  %1035 = vmatprep.subr.mxu0 0.0
  %1036 = vmatpush1.msra.mxu0 0.0
  %1037 = vmatprep.subr.mxu0 0.0
  %1038 = vmatpush1.msra.mxu0 0.0
  %1039 = vmatprep.subr.mxu0 0.0
  %1040 = vmatpush1.msra.mxu0 0.0
  %1041 = vmatprep.subr.mxu0 0.0
  %1042 = vmatpush1.msra.mxu0 0.0
  %1043 = vmatprep.subr.mxu0 0.0
  %1044 = vmatpush1.msra.mxu0 0.0
  %1045 = vmatprep.subr.mxu0 0.0
  %1046 = vmatpush1.msra.mxu0 0.0
  %1047 = vmatprep.mubr.f32.mxu0 0.0
  %1048 = vmatmul.mubr.f32.gmra.mrb[0].mxu0 %v978
  %v1049 = vpop.f32.mrb[0].mxu0
  %v1050 = vadd.f32 %v975, %v1049
  %v1051 = vpop.f32.mrb[0].mxu0
  %1052 = vmatprep.mubr.f32.mxu0 0.0
  %1053 = vmatmul.mubr.f32.gmra.mrb[0].mxu0 %v981
  %v1054 = vpop.f32.mrb[0].mxu0
  %v1055 = vadd.f32 %v975, %v1054
  %v1056 = vpop.f32.mrb[0].mxu0
  %1057 = vdwg.mxu0
  %1058 = vst [vmem:[%s6] sm:$0xff] %v1050
  %1059 = vst [vmem:[%s6 + $0x8] sm:$0xff] %v1055
  // Predicated region
  $region26: #{decoder_rnn_forward.1} parent=0 // pred_check
    _
  $region27: #{decoder_rnn_forward.1} parent=0 // pred_check_branch
    %1061 = sbr.rel (0) target = $region29
  $region28: #{decoder_rnn_forward.1} parent=0 // pred_region
    _
  $region29: #{decoder_rnn_forward.1} parent=0 // pred_fallthru
    _
  // Predicated region
  $region30: #{decoder_rnn_forward.1} parent=0 // pred_check
    _
  $region31: #{decoder_rnn_forward.1} parent=0 // pred_check_branch
    %1063 = sbr.rel (0) target = $region33
  $region32: #{decoder_rnn_forward.1} parent=0 // pred_region
    _
  $region33: #{decoder_rnn_forward.1} parent=0 // pred_fallthru
    _

</llo_original>
